<compile_context>
chip_gen: v7x
topology: tpu7x:2x2x1
jax: 0.10.0
libtpu: 0.0.40
codegen_flags: <defaults>
</compile_context>

<pallas_src>
import functools
import math

import jax
import jax.numpy as jnp
from jax import lax
from jax.experimental import pallas as pl
from jax.experimental.pallas import tpu as pltpu

BN_EPS = 1e-5
_TILE_M_MAX = 512  # >=512 rows/tile ~= 85% of HBM roofline for mem-bound kernels


def _round_up(x, m):
    return (x + m - 1) // m * m


# ---------------------------------------------------------------------------
# Pass 1: accumulate per-channel sum / sum-of-squares of h = x @ w1 + b1.
# Output (2, H) block stays resident across the "arbitrary" row-tile axis.
# ---------------------------------------------------------------------------
def _stats_kernel(x_ref, w1_ref, p_ref, stats_ref, *, m_valid, tile_m):
    i = pl.program_id(0)

    @pl.when(i == 0)
    def _init():
        stats_ref[...] = jnp.zeros_like(stats_ref)

    b1 = p_ref[0:1, :]                                         # (1, H)
    h = jnp.dot(x_ref[...], w1_ref[...],
                preferred_element_type=jnp.float32) + b1       # (tile_m, H)

    # Mask padding rows (beyond the true row count M) out of the statistics.
    row = lax.broadcasted_iota(jnp.int32, h.shape, 0) + i * tile_m
    valid = (row < m_valid).astype(jnp.float32)
    hm = h * valid                                             # valid in {0,1}

    sum_h = jnp.sum(hm, axis=0, keepdims=True)                 # (1, H)
    sum_h2 = jnp.sum(hm * hm, axis=0, keepdims=True)           # (1, H)
    stats_ref[...] += jnp.concatenate([sum_h, sum_h2], axis=0)


# ---------------------------------------------------------------------------
# Pass 2: recompute h, apply folded BN affine + ReLU, then Linear2 as a
# lane-dense (1, tile_m) dot_general.
# ---------------------------------------------------------------------------
def _apply_kernel(x_ref, w1_ref, p_ref, stats_ref, b2_ref, o_ref, *, m_valid):
    b1 = p_ref[0:1, :]
    gamma = p_ref[1:2, :]
    beta = p_ref[2:3, :]
    w2_row = p_ref[3:4, :]                                     # (1, H)

    inv_m = jnp.float32(1.0 / m_valid)
    mean = stats_ref[0:1, :] * inv_m
    ex2 = stats_ref[1:2, :] * inv_m
    var = jnp.maximum(ex2 - mean * mean, 0.0)                  # clamp: cancellation
    scale = gamma * lax.rsqrt(var + BN_EPS)
    shift = beta - mean * scale                                # folded BN affine

    h = jnp.dot(x_ref[...], w1_ref[...],
                preferred_element_type=jnp.float32) + b1       # (tile_m, H)
    h = jnp.maximum(h * scale + shift, 0.0)                    # one FMA + ReLU

    # Lane-dense output: contract H -> (1, tile_m), unmasked stores.
    y = lax.dot_general(w2_row, h, (((1,), (1,)), ((), ())),
                        preferred_element_type=jnp.float32) + b2_ref[0]
    o_ref[0] = y                                               # o_ref: (1,1,tile_m)


def outlayer_forward(x, params, *, tile_m_max=_TILE_M_MAX):
    """x: (B, N, in_num) float32 -> (B, N, 1) float32."""
    w1, b1, gamma, beta, w2, b2 = params
    B, N, D_in = x.shape
    H = w1.shape[1]
    M = B * N

    tile_m = min(tile_m_max, _round_up(M, 8))
    m_pad = _round_up(M, tile_m)
    num_tiles = m_pad // tile_m

    x2d = x.reshape(M, D_in).astype(jnp.float32)
    if m_pad != M:
        x2d = jnp.pad(x2d, ((0, m_pad - M), (0, 0)))

    # Pack the tiny per-channel params into one (4, H) block; b2 -> SMEM scalar.
    packed = jnp.concatenate(
        [b1.reshape(1, H), gamma.reshape(1, H),
         beta.reshape(1, H), w2.reshape(1, H)], axis=0).astype(jnp.float32)
    b2_flat = b2.reshape(1).astype(jnp.float32)

    # ---- Pass 1: per-channel sum / sumsq --------------------------------
    stats = pl.pallas_call(
        functools.partial(_stats_kernel, m_valid=M, tile_m=tile_m),
        out_shape=jax.ShapeDtypeStruct((2, H), jnp.float32),
        grid=(num_tiles,),
        in_specs=[
            pl.BlockSpec((tile_m, D_in), lambda i: (i, 0)),   # x row tile
            pl.BlockSpec((D_in, H), lambda i: (0, 0)),        # w1 (resident)
            pl.BlockSpec((4, H), lambda i: (0, 0)),           # packed params (resident)
        ],
        out_specs=pl.BlockSpec((2, H), lambda i: (0, 0)),     # resident accumulator
        compiler_params=pltpu.CompilerParams(
            dimension_semantics=("arbitrary",),
            vmem_limit_bytes=32 * 1024 * 1024),
        cost_estimate=pl.CostEstimate(
            flops=2 * m_pad * D_in * H + 4 * m_pad * H,
            transcendentals=0,
            bytes_accessed=m_pad * D_in * 4 + (D_in * H + 4 * H + 2 * H) * 4),
    )(x2d, w1, packed)

    # ---- Pass 2: recompute h, BN + ReLU + Linear2 ------------------------
    out = pl.pallas_call(
        functools.partial(_apply_kernel, m_valid=M),
        out_shape=jax.ShapeDtypeStruct((num_tiles, 1, tile_m), jnp.float32),
        grid=(num_tiles,),
        in_specs=[
            pl.BlockSpec((tile_m, D_in), lambda i: (i, 0)),   # x row tile
            pl.BlockSpec((D_in, H), lambda i: (0, 0)),        # w1 (resident)
            pl.BlockSpec((4, H), lambda i: (0, 0)),           # packed params (resident)
            pl.BlockSpec((2, H), lambda i: (0, 0)),           # stats (resident)
            pl.BlockSpec(memory_space=pltpu.MemorySpace.SMEM),  # b2 scalar
        ],
        out_specs=pl.BlockSpec((1, 1, tile_m), lambda i: (i, 0, 0)),
        compiler_params=pltpu.CompilerParams(
            dimension_semantics=("parallel",),
            vmem_limit_bytes=32 * 1024 * 1024),
        cost_estimate=pl.CostEstimate(
            flops=2 * m_pad * D_in * H + 6 * m_pad * H,
            transcendentals=H,
            bytes_accessed=m_pad * D_in * 4 + m_pad * 4),
    )(x2d, w1, packed, stats, b2_flat)

    return out.reshape(m_pad, 1)[:M].reshape(B, N, 1)


def init_outlayer_params(key, in_num, inter_dim):
    """torch.nn.Linear-style init (U[-1/sqrt(fan_in), +..]); BN gamma=1, beta=0.
    Weights stored as (in, out)."""
    k1, k2, k3, k4 = jax.random.split(key, 4)
    bound1 = 1.0 / math.sqrt(in_num)
    w1 = jax.random.uniform(k1, (in_num, inter_dim), jnp.float32, -bound1, bound1)
    b1 = jax.random.uniform(k2, (1, inter_dim), jnp.float32, -bound1, bound1)
    gamma = jnp.ones((1, inter_dim), jnp.float32)
    beta = jnp.zeros((1, inter_dim), jnp.float32)
    bound2 = 1.0 / math.sqrt(inter_dim)
    w2 = jax.random.uniform(k3, (inter_dim, 1), jnp.float32, -bound2, bound2)
    b2 = jax.random.uniform(k4, (1, 1), jnp.float32, -bound2, bound2)
    return (w1, b1, gamma, beta, w2, b2)


def _reference_forward(x, params):
    """Pure-JAX reference of the same forward (sanity check)."""
    w1, b1, gamma, beta, w2, b2 = params
    B, N, D = x.shape
    h = x.reshape(B * N, D) @ w1 + b1
    mean = h.mean(axis=0, keepdims=True)
    var = ((h - mean) ** 2).mean(axis=0, keepdims=True)
    h = (h - mean) / jnp.sqrt(var + BN_EPS) * gamma + beta
    h = jnp.maximum(h, 0.0)
    y = h @ w2 + b2
    return y.reshape(B, N, 1)


if __name__ == "__main__":
    key = jax.random.PRNGKey(0)

    # ---- Small shape consistent with OutLayer usage in GDN ----
    B, N, in_num, inter_dim = 2, 8, 64, 32
    kx, kp, kx2 = jax.random.split(key, 3)
    x = jax.random.normal(kx, (B, N, in_num), dtype=jnp.float32)
    params = init_outlayer_params(kp, in_num, inter_dim)

    y = jax.block_until_ready(outlayer_forward(x, params))
    y_ref = _reference_forward(x, params)
    assert y.shape == (B, N, 1)
    assert jnp.allclose(y, y_ref, atol=1e-4, rtol=1e-4), "mismatch vs reference (small)"

    # ---- Multi-tile check: exercises grid pipelining + row masking ----
    B2, N2 = 3, 200                      # M = 600 -> tile 512, padded to 1024
    x_big = jax.random.normal(kx2, (B2, N2, in_num), dtype=jnp.float32)
    y_big = jax.block_until_ready(outlayer_forward(x_big, params))
    y_big_ref = _reference_forward(x_big, params)
    assert y_big.shape == (B2, N2, 1)
    assert jnp.allclose(y_big, y_big_ref, atol=1e-4, rtol=1e-4), \
        "mismatch vs reference (tiled)"

    print("KERNEL_OK")
</pallas_src>

<mosaic_0001>
module attributes {stable_mosaic.version = 11 : i64} {
  func.func @_stats_kernel(%arg0: i32, %arg1: memref<16x64xf32, #tpu.memory_space<vmem>>, %arg2: memref<64x32xf32, #tpu.memory_space<vmem>>, %arg3: memref<4x32xf32, #tpu.memory_space<vmem>>, %arg4: memref<2x32xf32, #tpu.memory_space<vmem>>) attributes {dimension_semantics = [#tpu.dimension_semantics<arbitrary>], iteration_bounds = array<i64: 1>, scalar_prefetch = 0 : i64, scratch_operands = 0 : i64, tpu.core_type = #tpu.core_type<tc>, window_params = [{transform_indices = @transform_0, window_bounds = array<i64: 16, 64>}, {pipeline_mode = #tpu.pipeline_mode<synchronous>, transform_indices = @transform_1, window_bounds = array<i64: 64, 32>}, {pipeline_mode = #tpu.pipeline_mode<synchronous>, transform_indices = @transform_2, window_bounds = array<i64: 4, 32>}, {pipeline_mode = #tpu.pipeline_mode<synchronous>, transform_indices = @transform_3, window_bounds = array<i64: 2, 32>}]} {
    %c0_i32 = arith.constant 0 : i32
    %0 = arith.cmpi eq, %arg0, %c0_i32 : i32
    %1 = arith.extui %0 : i1 to i32
    %c0_i32_0 = arith.constant 0 : i32
    %2 = arith.cmpi ne, %1, %c0_i32_0 : i32
    scf.if %2 {
      %cst_13 = arith.constant 0.000000e+00 : f32
      %27 = vector.broadcast %cst_13 : f32 to vector<2x32xf32>
      %c0_14 = arith.constant 0 : index
      %c0_15 = arith.constant 0 : index
      %28 = vector.load %arg4[%c0_14, %c0_15] : memref<2x32xf32, #tpu.memory_space<vmem>>, vector<2x32xf32>
      tpu.vector_store %arg4[%c0_14, %c0_15], %27 {strides = array<i32>} : memref<2x32xf32, #tpu.memory_space<vmem>>, vector<2x32xf32>,
    } else {
    }
    %c0 = arith.constant 0 : index
    %c0_1 = arith.constant 0 : index
    %3 = vector.load %arg3[%c0, %c0_1] : memref<4x32xf32, #tpu.memory_space<vmem>>, vector<1x32xf32>
    %c0_2 = arith.constant 0 : index
    %c0_3 = arith.constant 0 : index
    %4 = vector.load %arg1[%c0_2, %c0_3] : memref<16x64xf32, #tpu.memory_space<vmem>>, vector<16x64xf32>
    %c0_4 = arith.constant 0 : index
    %c0_5 = arith.constant 0 : index
    %5 = vector.load %arg2[%c0_4, %c0_5] : memref<64x32xf32, #tpu.memory_space<vmem>>, vector<64x32xf32>
    %cst = arith.constant dense<0.000000e+00> : vector<16x32xf32>
    %6 = tpu.matmul %4, %5, %cst {dimension_numbers = #tpu.dot_dimension_numbers<[1], [0], [0], [1], [0, 0, 1, 1], [], []>} : vector<16x64xf32>, vector<64x32xf32>, vector<16x32xf32> -> vector<16x32xf32>
    %7 = vector.broadcast %3 : vector<1x32xf32> to vector<16x32xf32>
    %8 = arith.addf %6, %7 : vector<16x32xf32>
    %9 = tpu.iota {dimensions = array<i32: 0>} : vector<16x32xi32>
    %c16_i32 = arith.constant 16 : i32
    %10 = arith.muli %arg0, %c16_i32 : i32
    %11 = vector.broadcast %10 : i32 to vector<16x32xi32>
    %12 = arith.addi %9, %11 : vector<16x32xi32>
    %c16_i32_6 = arith.constant 16 : i32
    %13 = vector.broadcast %c16_i32_6 : i32 to vector<16x32xi32>
    %14 = arith.cmpi slt, %12, %13 : vector<16x32xi32>
    %15 = arith.extui %14 : vector<16x32xi1> to vector<16x32xi32>
    %16 = arith.sitofp %15 : vector<16x32xi32> to vector<16x32xf32>
    %17 = arith.mulf %8, %16 : vector<16x32xf32>
    %cst_7 = arith.constant dense<0.000000e+00> : vector<32xf32>
    %18 = vector.multi_reduction <add>, %17, %cst_7 [0] : vector<16x32xf32> to vector<32xf32>
    %19 = vector.shape_cast %18 : vector<32xf32> to vector<1x32xf32>
    %20 = arith.mulf %17, %17 : vector<16x32xf32>
    %cst_8 = arith.constant dense<0.000000e+00> : vector<32xf32>
    %21 = vector.multi_reduction <add>, %20, %cst_8 [0] : vector<16x32xf32> to vector<32xf32>
    %22 = vector.shape_cast %21 : vector<32xf32> to vector<1x32xf32>
    %c0_9 = arith.constant 0 : index
    %c0_10 = arith.constant 0 : index
    %23 = vector.load %arg4[%c0_9, %c0_10] : memref<2x32xf32, #tpu.memory_space<vmem>>, vector<2x32xf32>
    %24 = tpu.concatenate %19, %22 in 0 : vector<1x32xf32>, vector<1x32xf32> -> vector<2x32xf32>
    %25 = arith.addf %23, %24 : vector<2x32xf32>
    %c0_11 = arith.constant 0 : index
    %c0_12 = arith.constant 0 : index
    %26 = vector.load %arg4[%c0_11, %c0_12] : memref<2x32xf32, #tpu.memory_space<vmem>>, vector<2x32xf32>
    tpu.vector_store %arg4[%c0_11, %c0_12], %25 {strides = array<i32>} : memref<2x32xf32, #tpu.memory_space<vmem>>, vector<2x32xf32>,
    return
  }
  func.func @transform_0(%arg0: i32) -> (i32, i32) {
    %c0_i32 = arith.constant 0 : i32
    %c0_i32_0 = arith.constant 0 : i32
    return %arg0, %c0_i32 : i32, i32
  }
  func.func @transform_1(%arg0: i32) -> (i32, i32) {
    %c0_i32 = arith.constant 0 : i32
    %c0_i32_0 = arith.constant 0 : i32
    %c0_i32_1 = arith.constant 0 : i32
    return %c0_i32, %c0_i32_0 : i32, i32
  }
  func.func @transform_2(%arg0: i32) -> (i32, i32) {
    %c0_i32 = arith.constant 0 : i32
    %c0_i32_0 = arith.constant 0 : i32
    %c0_i32_1 = arith.constant 0 : i32
    return %c0_i32, %c0_i32_0 : i32, i32
  }
  func.func @transform_3(%arg0: i32) -> (i32, i32) {
    %c0_i32 = arith.constant 0 : i32
    %c0_i32_0 = arith.constant 0 : i32
    %c0_i32_1 = arith.constant 0 : i32
    return %c0_i32, %c0_i32_0 : i32, i32
  }
}

</mosaic_0001>

<llo_original>
// kernel: tpu_custom_call.1
$region0: #{tpu_custom_call.1}
  #allocation0 [shape = 'u32[]', space=smem, size = 0x4, offset = 0x4, fixed_abs, tag = 'smem constant byte address 0x4 - core index']
  #allocation1 [shape = 'u32[144,128]{1,0:T(1,128)}', space=vmem, size = 0x12000, scoped, tag = 'internal scratch']
  %s0 = inlined_call_operand.vmem [shape: f32[16,64], index: 0, kind: input, shape index: {}]
  %s1 = inlined_call_operand.vmem [shape: f32[64,32], index: 1, kind: input, shape index: {}]
  %s2 = inlined_call_operand.vmem [shape: f32[4,32], index: 2, kind: input, shape index: {}]
  %s3 = inlined_call_operand.hbm [shape: f32[2,32], index: 3, kind: output, shape index: {}]
  %s4 = sld [smem:[#allocation0]]
  $region26: #{tpu_custom_call.1} parent=0
    _
  %s6 = ssub.s32 1, %s4
  %s7 = scalar_select 0, %s6, %s4
  $region1: #{tpu_custom_call.1} parent=0
    #allocation2 [shape = 'u8[1024]{0}', space=vmem, size = 0x400, scoped, tag = 'output window, operand 0, single buffered']
    #allocation3 [shape = 's32[1]{0}', space=sflag, size = 0x4, scoped, tag = 'scoped memory for tpu_custom_call.1']
    %8 = vsyncpa [#allocation3], 0
    // Predicated region
    $region2: #{tpu_custom_call.1} parent=1 // pred_check
      _
    $region3: #{tpu_custom_call.1} parent=1 // pred_check_branch
      %10 = sbr.rel (0) target = $region5
    $region4: #{tpu_custom_call.1} parent=1 // pred_region
      _
    $region5: #{tpu_custom_call.1} parent=1 // pred_fallthru
      _
    // Predicated region
    $region6: #{tpu_custom_call.1} parent=1 // pred_check
      _
    $region7: #{tpu_custom_call.1} parent=1 // pred_check_branch
      %12 = sbr.rel (0) target = $region9
    $region8: #{tpu_custom_call.1} parent=1 // pred_region
      _
    $region9: #{tpu_custom_call.1} parent=1 // pred_fallthru
      _
    // Predicated region
    $region10: #{tpu_custom_call.1} parent=1 // pred_check
      _
    $region11: #{tpu_custom_call.1} parent=1 // pred_check_branch
      %14 = sbr.rel (0) target = $region13
    $region12: #{tpu_custom_call.1} parent=1 // pred_region
      _
    $region13: #{tpu_custom_call.1} parent=1 // pred_fallthru
      _
    %p15 = scmp.eq.s32.totalorder 0, 0
    // Predicated region
    $region14: #{tpu_custom_call.1} parent=1 // pred_check
      %p16 = pneg %p15
    $region15: #{tpu_custom_call.1} parent=1 // pred_check_branch
      %18 = sbr.rel (%p16) target = $region17
    $region16: #{tpu_custom_call.1} parent=1 // pred_region
      %vm19 = vcmask 254976
      %20 = vst.msk [vmem:[#allocation2] sm:$0x3] %vm19, 0.0
    $region17: #{tpu_custom_call.1} parent=1 // pred_fallthru
      _
    %v21 = vld [vmem:[%s2] sm:$0x1]
    %v22 = vld [vmem:[%s0] sm:$0xff]
    %v23 = vld [vmem:[%s0 + $0x8] sm:$0xff]
    %v24 = vld [vmem:[%s1] sm:$0xff]
    %v25 = vld [vmem:[%s1 + $0x8] sm:$0xff]
    %v26 = vld [vmem:[%s1 + $0x10] sm:$0xff]
    %v27 = vld [vmem:[%s1 + $0x18] sm:$0xff]
    %v28 = vld [vmem:[%s1 + $0x20] sm:$0xff]
    %v29 = vld [vmem:[%s1 + $0x28] sm:$0xff]
    %v30 = vld [vmem:[%s1 + $0x30] sm:$0xff]
    %v31 = vld [vmem:[%s1 + $0x38] sm:$0xff]
    %v32 = vlaneseq
    %v33 = vshrl.u32 %v32, 7
    %v34 = vsub.s32 0, %v33
    %v35 = vrot.slane %v21, %v34
    %vm36 = vcmask 523264
    %v38 = vsel %vm36, %v22, 0
    %v41 = vsel %vm36, %v23, 0
    %43 = vmatprep.subr.mxu0 0.0
    %44 = vmatpush1.msra.mxu0 %v24
    %45 = vmatprep.subr.mxu0 0.0
    %46 = vmatpush1.msra.mxu0 %v25
    %47 = vmatprep.subr.mxu0 0.0
    %48 = vmatpush1.msra.mxu0 %v26
    %49 = vmatprep.subr.mxu0 0.0
    %50 = vmatpush1.msra.mxu0 %v27
    %51 = vmatprep.subr.mxu0 0.0
    %52 = vmatpush1.msra.mxu0 %v28
    %53 = vmatprep.subr.mxu0 0.0
    %54 = vmatpush1.msra.mxu0 %v29
    %55 = vmatprep.subr.mxu0 0.0
    %56 = vmatpush1.msra.mxu0 %v30
    %57 = vmatprep.subr.mxu0 0.0
    %58 = vmatpush1.msra.mxu0 %v31
    %59 = vmatprep.subr.mxu0 0.0
    %60 = vmatpush1.msra.mxu0 0.0
    %61 = vmatprep.subr.mxu0 0.0
    %62 = vmatpush1.msra.mxu0 0.0
    %63 = vmatprep.subr.mxu0 0.0
    %64 = vmatpush1.msra.mxu0 0.0
    %65 = vmatprep.subr.mxu0 0.0
    %66 = vmatpush1.msra.mxu0 0.0
    %67 = vmatprep.subr.mxu0 0.0
    %68 = vmatpush1.msra.mxu0 0.0
    %69 = vmatprep.subr.mxu0 0.0
    %70 = vmatpush1.msra.mxu0 0.0
    %71 = vmatprep.subr.mxu0 0.0
    %72 = vmatpush1.msra.mxu0 0.0
    %73 = vmatprep.subr.mxu0 0.0
    %74 = vmatpush1.msra.mxu0 0.0
    %75 = vmatprep.subr.mxu0 0.0
    %76 = vmatpush1.msra.mxu0 0.0
    %77 = vmatprep.subr.mxu0 0.0
    %78 = vmatpush1.msra.mxu0 0.0
    %79 = vmatprep.subr.mxu0 0.0
    %80 = vmatpush1.msra.mxu0 0.0
    %81 = vmatprep.subr.mxu0 0.0
    %82 = vmatpush1.msra.mxu0 0.0
    %83 = vmatprep.subr.mxu0 0.0
    %84 = vmatpush1.msra.mxu0 0.0
    %85 = vmatprep.subr.mxu0 0.0
    %86 = vmatpush1.msra.mxu0 0.0
    %87 = vmatprep.subr.mxu0 0.0
    %88 = vmatpush1.msra.mxu0 0.0
    %89 = vmatprep.subr.mxu0 0.0
    %90 = vmatpush1.msra.mxu0 0.0
    %91 = vmatprep.subr.mxu0 0.0
    %92 = vmatpush1.msra.mxu0 0.0
    %93 = vmatprep.subr.mxu0 0.0
    %94 = vmatpush1.msra.mxu0 0.0
    %95 = vmatprep.subr.mxu0 0.0
    %96 = vmatpush1.msra.mxu0 0.0
    %97 = vmatprep.subr.mxu0 0.0
    %98 = vmatpush1.msra.mxu0 0.0
    %99 = vmatprep.subr.mxu0 0.0
    %100 = vmatpush1.msra.mxu0 0.0
    %101 = vmatprep.subr.mxu0 0.0
    %102 = vmatpush1.msra.mxu0 0.0
    %103 = vmatprep.subr.mxu0 0.0
    %104 = vmatpush1.msra.mxu0 0.0
    %105 = vmatprep.subr.mxu0 0.0
    %106 = vmatpush1.msra.mxu0 0.0
    %107 = vmatprep.mubr.f32.mxu0 0.0
    %108 = vmatmul.mubr.f32.gmra.mrb[0].mxu0 %v38
    %v109 = vpop.f32.mrb[0].mxu0
    %v110 = vadd.f32 %v35, %v109
    %v111 = vpop.f32.mrb[0].mxu0
    %112 = vmatprep.mubr.f32.mxu0 0.0
    %113 = vmatmul.mubr.f32.gmra.mrb[0].mxu0 %v41
    %v114 = vpop.f32.mrb[0].mxu0
    %v115 = vadd.f32 %v35, %v114
    %v116 = vpop.f32.mrb[0].mxu0
    %117 = vdwg.mxu0
    %v118 = vlaneseq
    %v119 = vshrl.u32 %v118, 7
    %v120 = vadd.s32 %v119, 8
    %s121 = smul.u32 0, 16
    %v122 = vstv %s121
    %v123 = vadd.s32 %v119, %v122
    %v124 = vadd.s32 %v120, %v122
    %vm125 = vcmp.lt.s32.totalorder %v123, 16
    %vm126 = vcmp.lt.s32.totalorder %v124, 16
    %v127 = vsel %vm125, 1, 0
    %v128 = vsel %vm126, 1, 0
    %v129 = vcvt.s32.f32 %v127
    %v130 = vcvt.s32.f32 %v128
    %v131 = vmul.f32 %v110, %v129
    %v132 = vmul.f32 %v115, %v130
    %vm133 = vcmask 261120
    %v134 = vsel %vm133, %v131, 0.0
    %v135 = vsel %vm133, %v132, 0.0
    %v136 = vadd.f32 %v134, %v135
    %v137 = vrot.slane %v136, 4
    %v138 = vadd.f32 %v136, %v137
    %v139 = vrot.slane %v138, 2
    %v140 = vadd.f32 %v138, %v139
    %v141 = vrot.slane %v140, 1
    %v142 = vadd.f32 %v140, %v141
    %v143 = vmul.f32 %v131, %v131
    %v144 = vmul.f32 %v132, %v132
    %v145 = vsel %vm133, %v143, 0.0
    %v146 = vsel %vm133, %v144, 0.0
    %v147 = vadd.f32 %v145, %v146
    %v148 = vrot.slane %v147, 4
    %v149 = vadd.f32 %v147, %v148
    %v150 = vrot.slane %v149, 2
    %v151 = vadd.f32 %v149, %v150
    %v152 = vrot.slane %v151, 1
    %v153 = vadd.f32 %v151, %v152
    %v154 = vld [vmem:[#allocation2] sm:$0x3]
    %vm155 = vcmask 1040384
    %v156 = vsel %vm155, %v142, %v153
    %v157 = vadd.f32 %v154, %v156
    %vm158 = vcmask 254976
    %159 = vst.msk [vmem:[#allocation2] sm:$0x3] %vm158, %v157
    // Predicated region
    $region18: #{tpu_custom_call.1} parent=1 // pred_check
      _
    $region19: #{tpu_custom_call.1} parent=1 // pred_check_branch
      %161 = sbr.rel (0) target = $region21
    $region20: #{tpu_custom_call.1} parent=1 // pred_region
      %s163 = ssub.s32 32, 32
      %164 = vsyncadd [#allocation3], %s163
      %s166 = sshll.u32 [#allocation2], 4
      %s167 = int_to_ptr.vmem [resolvable:$true] %s166
      %169 = dma.vmem_to_hbm [thread:$0]  %s167, 32, %s3, [#allocation3]
    $region21: #{tpu_custom_call.1} parent=1 // pred_fallthru
      _
    // Predicated region
    $region22: #{tpu_custom_call.1} parent=1 // pred_check
      _
    $region23: #{tpu_custom_call.1} parent=1 // pred_check_branch
      %171 = sbr.rel (0) target = $region25
    $region24: #{tpu_custom_call.1} parent=1 // pred_region
      %172 = dma.done [#allocation3], 32
    $region25: #{tpu_custom_call.1} parent=1 // pred_fallthru
      _
    %173 = vsyncpa [#allocation3], 1

</llo_original>
